<compile_context>
chip_gen: v7x
topology: tpu7x:2x2x1
jax: 0.10.0
libtpu: 0.0.40
codegen_flags: <defaults>
</compile_context>

<pallas_src>
import jax
import jax.numpy as jnp
from jax import lax
from jax.experimental import pallas as pl
from jax.experimental.pallas import tpu as pltpu


def _hpass(v, W):
    """Horizontal (lane-axis) pass of the separable Sobel filter.

    v: (R, W) rows.  Returns
      a = v[:, j-1] + 2 v[:, j] + v[:, j+1]   (smooth     -> feeds Gy)
      b = v[:, j-1] -              v[:, j+1]  (difference -> feeds Gx)
    with zero padding at j = 0 and j = W-1 (conv padding=1 semantics).
    The +-1 column shifts use pltpu.roll (XLU slot) on lane-dense data with the
    wrapped-around column masked back to zero.
    """
    ax = v.ndim - 1
    col = lax.broadcasted_iota(jnp.int32, v.shape, ax)
    v_l = jnp.where(col == 0, 0.0, pltpu.roll(v, 1, axis=ax))        # v[:, j-1]
    v_r = jnp.where(col == W - 1, 0.0, pltpu.roll(v, W - 1, axis=ax))  # v[:, j+1]
    return v_l + 2.0 * v + v_r, v_l - v_r


def _sobel_kernel(x_ref, x_hbm_ref, out_ref, halo_ref, halo_sem):
    # x_ref    : (1, 1, TH, W)  VMEM strip of the current image (auto-pipelined)
    # x_hbm_ref: (N, 1, H, W)   raw HBM ref, read only for the 1-row halos
    # out_ref  : (1, 2, TH, W)  output strip (channel 0 = Gx, channel 1 = Gy)
    # halo_ref : (2, 1, W)      VMEM scratch: [0] = row above strip, [1] = below
    # halo_sem : (2,)           DMA semaphores for the halo fetches
    TH, W = x_ref.shape[2], x_ref.shape[3]
    H = x_hbm_ref.shape[2]

    n = pl.program_id(0)
    h = pl.program_id(1)
    nh = pl.num_programs(1)
    r0 = h * TH                       # first image row covered by this strip

    def halo_copy(slot, row):
        return pltpu.make_async_copy(
            x_hbm_ref.at[n, 0, pl.ds(row, 1), :],
            halo_ref.at[slot],
            halo_sem.at[slot],
        )

    # Kick off the (tiny) halo-row DMAs first so they overlap with the
    # horizontal pass below; at the image borders zero-fill instead (this is
    # exactly the conv padding=1 semantics).
    @pl.when(h > 0)
    def _():
        halo_copy(0, r0 - 1).start()

    @pl.when(h == 0)
    def _():
        halo_ref[0] = jnp.zeros((1, W), jnp.float32)

    @pl.when(h < nh - 1)
    def _():
        halo_copy(1, r0 + TH).start()

    @pl.when(h == nh - 1)
    def _():
        halo_ref[1] = jnp.zeros((1, W), jnp.float32)

    # ---- horizontal separable pass on the strip (lane-dense) -----------------
    x = x_ref[0, 0]                                     # (TH, W)
    if H % TH != 0:
        # Last strip may extend past the image; rows past H act as zero padding
        # (their own output rows are dropped by the partial write-back anyway).
        row = lax.broadcasted_iota(jnp.int32, (TH, W), 0)
        x = jnp.where(r0 + row < H, x, 0.0)
    a, b = _hpass(x, W)

    # ---- same pass on the two halo rows (after their DMAs complete) ----------
    @pl.when(h > 0)
    def _():
        halo_copy(0, r0 - 1).wait()

    @pl.when(h < nh - 1)
    def _():
        halo_copy(1, r0 + TH).wait()

    a_up, b_up = _hpass(halo_ref[0], W)                 # row r0 - 1  (or zeros)
    a_dn, b_dn = _hpass(halo_ref[1], W)                 # row r0 + TH (or zeros)

    # ---- vertical pass: 1-row halo on each side, sublane-axis shifts ---------
    a_full = jnp.concatenate([a_up, a, a_dn], axis=0)   # (TH + 2, W)
    b_full = jnp.concatenate([b_up, b, b_dn], axis=0)

    gx = b_full[0:TH] + 2.0 * b_full[1:TH + 1] + b_full[2:TH + 2]
    gy = a_full[0:TH] - a_full[2:TH + 2]

    # Full, unmasked lane-dense (TH, W) stores.
    out_ref[0, 0] = gx.astype(out_ref.dtype)
    out_ref[0, 1] = gy.astype(out_ref.dtype)


def _pick_strip_rows(H, W, target_strip_bytes=512 * 1024):
    """Rows per strip: largest multiple of 8 whose f32 (TH, W) strip stays under
    `target_strip_bytes`.  With double-buffered input (1x) + output (2x) blocks
    plus in-kernel temporaries, peak VMEM stays ~< 8 MiB — comfortable on
    v5e/v6e (128 MiB) and v7x (64 MiB)."""
    max_rows = max(8, target_strip_bytes // (4 * W))
    if H <= max_rows:
        return H                      # whole image in one strip
    return (max_rows // 8) * 8


def sobel(x, *, strip_rows=None, out_dtype=jnp.float32):
    """Pallas TPU Sobel filter: (N, 1, H, W) -> (N, 2, H, W) [Gx, Gy]."""
    N, C, H, W = x.shape
    assert C == 1, "Sobel expects a single input channel (nn.Conv2d(1, 2, ...))"
    if x.dtype != jnp.float32:
        x = x.astype(jnp.float32)

    TH = _pick_strip_rows(H, W) if strip_rows is None else min(strip_rows, H)
    assert TH == H or TH % 8 == 0, "strip_rows must equal H or be a multiple of 8"
    nh = pl.cdiv(H, TH)

    out = pl.pallas_call(
        _sobel_kernel,
        out_shape=jax.ShapeDtypeStruct((N, 2, H, W), out_dtype),
        grid_spec=pltpu.PrefetchScalarGridSpec(
            num_scalar_prefetch=0,
            grid=(N, nh),
            in_specs=[
                # Lane-dense strip of the image: last dim is exactly W.
                pl.BlockSpec((1, 1, TH, W), lambda n, h: (n, 0, h, 0)),
                # Same array, left in HBM for the manual 1-row halo DMAs.
                pl.BlockSpec(memory_space=pl.ANY),
            ],
            out_specs=pl.BlockSpec((1, 2, TH, W), lambda n, h: (n, 0, h, 0)),
            scratch_shapes=[
                pltpu.VMEM((2, 1, W), jnp.float32),     # halo rows
                pltpu.SemaphoreType.DMA((2,)),          # halo DMA semaphores
            ],
        ),
        compiler_params=pltpu.CompilerParams(
            # Both axes are independent -> let megacore (v7x: 2 TCs) split either.
            dimension_semantics=("parallel", "parallel"),
            vmem_limit_bytes=32 * 1024 * 1024,
        ),
    )(x, x)

    # PyTorch: out.contiguous().view(-1, 2, H, W) — identical shape here.
    return out.reshape(-1, 2, H, W)


def _sobel_reference(x):
    """Pure-JAX reference matching nn.Conv2d(1, 2, 3, padding=1) cross-correlation
    with kx=[[1,0,-1],[2,0,-2],[1,0,-1]], ky=[[1,2,1],[0,0,0],[-1,-2,-1]]."""
    N, C, H, W = x.shape
    p = jnp.pad(x[:, 0].astype(jnp.float32), ((0, 0), (1, 1), (1, 1)))
    s = lambda di, dj: p[:, di:di + H, dj:dj + W]
    gx = s(0, 0) - s(0, 2) + 2.0 * s(1, 0) - 2.0 * s(1, 2) + s(2, 0) - s(2, 2)
    gy = s(0, 0) + 2.0 * s(0, 1) + s(0, 2) - s(2, 0) - 2.0 * s(2, 1) - s(2, 2)
    return jnp.stack([gx, gy], axis=1)


if __name__ == "__main__":
    key = jax.random.PRNGKey(0)
    # (shape, forced strip_rows): lane-aligned single-strip case, a multi-strip
    # case (exercises the halo DMAs), and a partial-last-strip case.
    cases = [
        ((2, 1, 128, 128), None),
        ((2, 1, 64, 256), 16),
        ((1, 1, 40, 128), 16),
    ]
    for i, (shape, strip) in enumerate(cases):
        key, sub = jax.random.split(key)
        x = jax.random.normal(sub, shape, dtype=jnp.float32)
        out = sobel(x, strip_rows=strip)
        jax.block_until_ready(out)
        assert out.shape == (shape[0], 2, shape[2], shape[3])
        ref = _sobel_reference(x)
        assert jnp.allclose(out, ref, atol=1e-5, rtol=1e-5), f"mismatch in case {i}"
    print("KERNEL_OK")
</pallas_src>

<mosaic_0001>
module attributes {stable_mosaic.version = 11 : i64} {
  func.func @_sobel_kernel(%arg0: i32, %arg1: i32, %arg2: memref<1x1x128x128xf32, #tpu.memory_space<vmem>>, %arg3: memref<2x1x128x128xf32, #tpu.memory_space<any>>, %arg4: memref<1x2x128x128xf32, #tpu.memory_space<vmem>>, %arg5: memref<2x1x128xf32, #tpu.memory_space<vmem>>, %arg6: memref<2x!tpu.dma_semaphore, #tpu.memory_space<semaphore_mem>>) attributes {dimension_semantics = [#tpu.dimension_semantics<parallel>, #tpu.dimension_semantics<parallel>], iteration_bounds = array<i64: 2, 1>, scalar_prefetch = 0 : i64, scratch_operands = 2 : i64, tpu.core_type = #tpu.core_type<tc>, window_params = [{transform_indices = @transform_0, window_bounds = array<i64: 1, 1, 128, 128>}, {}, {transform_indices = @transform_2, window_bounds = array<i64: 1, 2, 128, 128>}]} {
    %c128_i32 = arith.constant 128 : i32
    %0 = arith.muli %arg1, %c128_i32 : i32
    %c0_i32 = arith.constant 0 : i32
    %1 = arith.cmpi sgt, %arg1, %c0_i32 : i32
    %2 = arith.extui %1 : i1 to i32
    %c0_i32_0 = arith.constant 0 : i32
    %3 = arith.cmpi ne, %2, %c0_i32_0 : i32
    scf.if %3 {
      %c1_i32_46 = arith.constant 1 : i32
      %91 = arith.subi %0, %c1_i32_46 : i32
      %c0_i32_47 = arith.constant 0 : i32
      %c0_i32_48 = arith.constant 0 : i32
      %c0_i32_49 = arith.constant 0 : i32
      %c0_i32_50 = arith.constant 0 : i32
      %92 = tpu.memref_slice %arg3[%arg0, %c0_i32_47, %91, %c0_i32_50] : memref<2x1x128x128xf32, #tpu.memory_space<any>> -> memref<1x1x1x128xf32, #tpu.memory_space<any>>
      %93 = tpu.memref_squeeze %92 : memref<1x1x1x128xf32, #tpu.memory_space<any>> -> memref<1x128xf32, #tpu.memory_space<any>>
      %c0_i32_51 = arith.constant 0 : i32
      %c0_i32_52 = arith.constant 0 : i32
      %94 = tpu.memref_slice %arg5[%c0_i32_48, %c0_i32_51, %c0_i32_52] : memref<2x1x128xf32, #tpu.memory_space<vmem>> -> memref<1x1x128xf32, #tpu.memory_space<vmem>>
      %95 = tpu.memref_squeeze %94 : memref<1x1x128xf32, #tpu.memory_space<vmem>> -> memref<1x128xf32, #tpu.memory_space<vmem>>
      %96 = tpu.memref_slice %arg6[%c0_i32_49] : memref<2x!tpu.dma_semaphore, #tpu.memory_space<semaphore_mem>> -> memref<1x!tpu.dma_semaphore, #tpu.memory_space<semaphore_mem>>
      %97 = tpu.memref_squeeze %96 : memref<1x!tpu.dma_semaphore, #tpu.memory_space<semaphore_mem>> -> memref<!tpu.dma_semaphore, #tpu.memory_space<semaphore_mem>>
      tpu.enqueue_dma source(%93 : memref<1x128xf32, #tpu.memory_space<any>>) target(%95 : memref<1x128xf32, #tpu.memory_space<vmem>>) target_semaphore(%97 : memref<!tpu.dma_semaphore, #tpu.memory_space<semaphore_mem>>)
    } else {
    }
    %c0_i32_1 = arith.constant 0 : i32
    %4 = arith.cmpi eq, %arg1, %c0_i32_1 : i32
    %5 = arith.extui %4 : i1 to i32
    %c0_i32_2 = arith.constant 0 : i32
    %6 = arith.cmpi ne, %5, %c0_i32_2 : i32
    scf.if %6 {
      %cst_46 = arith.constant 0.000000e+00 : f32
      %91 = vector.broadcast %cst_46 : f32 to vector<1x128xf32>
      %c0_47 = arith.constant 0 : index
      %c0_48 = arith.constant 0 : index
      %c0_49 = arith.constant 0 : index
      %92 = vector.load %arg5[%c0_47, %c0_48, %c0_49] : memref<2x1x128xf32, #tpu.memory_space<vmem>>, vector<1x1x128xf32>
      %93 = vector.shape_cast %92 : vector<1x1x128xf32> to vector<1x128xf32>
      %94 = vector.shape_cast %91 : vector<1x128xf32> to vector<1x1x128xf32>
      tpu.vector_store %arg5[%c0_47, %c0_48, %c0_49], %94 {strides = array<i32>} : memref<2x1x128xf32, #tpu.memory_space<vmem>>, vector<1x1x128xf32>,
    } else {
    }
    %c0_i32_3 = arith.constant 0 : i32
    %7 = arith.cmpi slt, %arg1, %c0_i32_3 : i32
    %8 = arith.extui %7 : i1 to i32
    %c0_i32_4 = arith.constant 0 : i32
    %9 = arith.cmpi ne, %8, %c0_i32_4 : i32
    scf.if %9 {
      %c128_i32_46 = arith.constant 128 : i32
      %91 = arith.addi %0, %c128_i32_46 : i32
      %c0_i32_47 = arith.constant 0 : i32
      %c1_i32_48 = arith.constant 1 : i32
      %c1_i32_49 = arith.constant 1 : i32
      %c0_i32_50 = arith.constant 0 : i32
      %92 = tpu.memref_slice %arg3[%arg0, %c0_i32_47, %91, %c0_i32_50] : memref<2x1x128x128xf32, #tpu.memory_space<any>> -> memref<1x1x1x128xf32, #tpu.memory_space<any>>
      %93 = tpu.memref_squeeze %92 : memref<1x1x1x128xf32, #tpu.memory_space<any>> -> memref<1x128xf32, #tpu.memory_space<any>>
      %c0_i32_51 = arith.constant 0 : i32
      %c0_i32_52 = arith.constant 0 : i32
      %94 = tpu.memref_slice %arg5[%c1_i32_48, %c0_i32_51, %c0_i32_52] : memref<2x1x128xf32, #tpu.memory_space<vmem>> -> memref<1x1x128xf32, #tpu.memory_space<vmem>>
      %95 = tpu.memref_squeeze %94 : memref<1x1x128xf32, #tpu.memory_space<vmem>> -> memref<1x128xf32, #tpu.memory_space<vmem>>
      %96 = tpu.memref_slice %arg6[%c1_i32_49] : memref<2x!tpu.dma_semaphore, #tpu.memory_space<semaphore_mem>> -> memref<1x!tpu.dma_semaphore, #tpu.memory_space<semaphore_mem>>
      %97 = tpu.memref_squeeze %96 : memref<1x!tpu.dma_semaphore, #tpu.memory_space<semaphore_mem>> -> memref<!tpu.dma_semaphore, #tpu.memory_space<semaphore_mem>>
      tpu.enqueue_dma source(%93 : memref<1x128xf32, #tpu.memory_space<any>>) target(%95 : memref<1x128xf32, #tpu.memory_space<vmem>>) target_semaphore(%97 : memref<!tpu.dma_semaphore, #tpu.memory_space<semaphore_mem>>)
    } else {
    }
    %c0_i32_5 = arith.constant 0 : i32
    %10 = arith.cmpi eq, %arg1, %c0_i32_5 : i32
    %11 = arith.extui %10 : i1 to i32
    %c0_i32_6 = arith.constant 0 : i32
    %12 = arith.cmpi ne, %11, %c0_i32_6 : i32
    scf.if %12 {
      %cst_46 = arith.constant 0.000000e+00 : f32
      %91 = vector.broadcast %cst_46 : f32 to vector<1x128xf32>
      %c1_47 = arith.constant 1 : index
      %c0_48 = arith.constant 0 : index
      %c0_49 = arith.constant 0 : index
      %92 = vector.load %arg5[%c1_47, %c0_48, %c0_49] : memref<2x1x128xf32, #tpu.memory_space<vmem>>, vector<1x1x128xf32>
      %93 = vector.shape_cast %92 : vector<1x1x128xf32> to vector<1x128xf32>
      %94 = vector.shape_cast %91 : vector<1x128xf32> to vector<1x1x128xf32>
      tpu.vector_store %arg5[%c1_47, %c0_48, %c0_49], %94 {strides = array<i32>} : memref<2x1x128xf32, #tpu.memory_space<vmem>>, vector<1x1x128xf32>,
    } else {
    }
    %c0 = arith.constant 0 : index
    %c0_7 = arith.constant 0 : index
    %c0_8 = arith.constant 0 : index
    %c0_9 = arith.constant 0 : index
    %13 = vector.load %arg2[%c0, %c0_7, %c0_8, %c0_9] : memref<1x1x128x128xf32, #tpu.memory_space<vmem>>, vector<1x1x128x128xf32>
    %14 = vector.shape_cast %13 : vector<1x1x128x128xf32> to vector<128x128xf32>
    %15 = tpu.iota {dimensions = array<i32: 1>} : vector<128x128xi32>
    %c0_i32_10 = arith.constant 0 : i32
    %16 = vector.broadcast %c0_i32_10 : i32 to vector<128x128xi32>
    %17 = arith.cmpi eq, %15, %16 : vector<128x128xi32>
    %c1_i32 = arith.constant 1 : i32
    %18 = tpu.dynamic_rotate %14 by %c1_i32 dim 1 : vector<128x128xf32>, i32 -> vector<128x128xf32>
    %cst = arith.constant 0.000000e+00 : f32
    %19 = vector.broadcast %cst : f32 to vector<128x128xf32>
    %20 = arith.select %17, %19, %18 : vector<128x128xi1>, vector<128x128xf32>
    %c127_i32 = arith.constant 127 : i32
    %21 = vector.broadcast %c127_i32 : i32 to vector<128x128xi32>
    %22 = arith.cmpi eq, %15, %21 : vector<128x128xi32>
    %c127_i32_11 = arith.constant 127 : i32
    %23 = tpu.dynamic_rotate %14 by %c127_i32_11 dim 1 : vector<128x128xf32>, i32 -> vector<128x128xf32>
    %cst_12 = arith.constant 0.000000e+00 : f32
    %24 = vector.broadcast %cst_12 : f32 to vector<128x128xf32>
    %25 = arith.select %22, %24, %23 : vector<128x128xi1>, vector<128x128xf32>
    %cst_13 = arith.constant 2.000000e+00 : f32
    %26 = vector.broadcast %cst_13 : f32 to vector<128x128xf32>
    %27 = arith.mulf %26, %14 : vector<128x128xf32>
    %28 = arith.addf %20, %27 : vector<128x128xf32>
    %29 = arith.addf %28, %25 : vector<128x128xf32>
    %30 = arith.subf %20, %25 : vector<128x128xf32>
    %c0_i32_14 = arith.constant 0 : i32
    %31 = arith.cmpi sgt, %arg1, %c0_i32_14 : i32
    %32 = arith.extui %31 : i1 to i32
    %c0_i32_15 = arith.constant 0 : i32
    %33 = arith.cmpi ne, %32, %c0_i32_15 : i32
    scf.if %33 {
      %c1_i32_46 = arith.constant 1 : i32
      %91 = arith.subi %0, %c1_i32_46 : i32
      %c0_i32_47 = arith.constant 0 : i32
      %c0_i32_48 = arith.constant 0 : i32
      %c0_i32_49 = arith.constant 0 : i32
      %c0_i32_50 = arith.constant 0 : i32
      %92 = tpu.memref_slice %arg3[%arg0, %c0_i32_47, %91, %c0_i32_50] : memref<2x1x128x128xf32, #tpu.memory_space<any>> -> memref<1x1x1x128xf32, #tpu.memory_space<any>>
      %93 = tpu.memref_squeeze %92 : memref<1x1x1x128xf32, #tpu.memory_space<any>> -> memref<1x128xf32, #tpu.memory_space<any>>
      %c0_i32_51 = arith.constant 0 : i32
      %c0_i32_52 = arith.constant 0 : i32
      %94 = tpu.memref_slice %arg5[%c0_i32_48, %c0_i32_51, %c0_i32_52] : memref<2x1x128xf32, #tpu.memory_space<vmem>> -> memref<1x1x128xf32, #tpu.memory_space<vmem>>
      %95 = tpu.memref_squeeze %94 : memref<1x1x128xf32, #tpu.memory_space<vmem>> -> memref<1x128xf32, #tpu.memory_space<vmem>>
      %96 = tpu.memref_slice %arg6[%c0_i32_49] : memref<2x!tpu.dma_semaphore, #tpu.memory_space<semaphore_mem>> -> memref<1x!tpu.dma_semaphore, #tpu.memory_space<semaphore_mem>>
      %97 = tpu.memref_squeeze %96 : memref<1x!tpu.dma_semaphore, #tpu.memory_space<semaphore_mem>> -> memref<!tpu.dma_semaphore, #tpu.memory_space<semaphore_mem>>
      tpu.wait_dma2 semaphore(%97 : memref<!tpu.dma_semaphore, #tpu.memory_space<semaphore_mem>>) src(%93 : memref<1x128xf32, #tpu.memory_space<any>>) dst(%95 : memref<1x128xf32, #tpu.memory_space<vmem>>)
    } else {
    }
    %c0_i32_16 = arith.constant 0 : i32
    %34 = arith.cmpi slt, %arg1, %c0_i32_16 : i32
    %35 = arith.extui %34 : i1 to i32
    %c0_i32_17 = arith.constant 0 : i32
    %36 = arith.cmpi ne, %35, %c0_i32_17 : i32
    scf.if %36 {
      %c128_i32_46 = arith.constant 128 : i32
      %91 = arith.addi %0, %c128_i32_46 : i32
      %c0_i32_47 = arith.constant 0 : i32
      %c1_i32_48 = arith.constant 1 : i32
      %c1_i32_49 = arith.constant 1 : i32
      %c0_i32_50 = arith.constant 0 : i32
      %92 = tpu.memref_slice %arg3[%arg0, %c0_i32_47, %91, %c0_i32_50] : memref<2x1x128x128xf32, #tpu.memory_space<any>> -> memref<1x1x1x128xf32, #tpu.memory_space<any>>
      %93 = tpu.memref_squeeze %92 : memref<1x1x1x128xf32, #tpu.memory_space<any>> -> memref<1x128xf32, #tpu.memory_space<any>>
      %c0_i32_51 = arith.constant 0 : i32
      %c0_i32_52 = arith.constant 0 : i32
      %94 = tpu.memref_slice %arg5[%c1_i32_48, %c0_i32_51, %c0_i32_52] : memref<2x1x128xf32, #tpu.memory_space<vmem>> -> memref<1x1x128xf32, #tpu.memory_space<vmem>>
      %95 = tpu.memref_squeeze %94 : memref<1x1x128xf32, #tpu.memory_space<vmem>> -> memref<1x128xf32, #tpu.memory_space<vmem>>
      %96 = tpu.memref_slice %arg6[%c1_i32_49] : memref<2x!tpu.dma_semaphore, #tpu.memory_space<semaphore_mem>> -> memref<1x!tpu.dma_semaphore, #tpu.memory_space<semaphore_mem>>
      %97 = tpu.memref_squeeze %96 : memref<1x!tpu.dma_semaphore, #tpu.memory_space<semaphore_mem>> -> memref<!tpu.dma_semaphore, #tpu.memory_space<semaphore_mem>>
      tpu.wait_dma2 semaphore(%97 : memref<!tpu.dma_semaphore, #tpu.memory_space<semaphore_mem>>) src(%93 : memref<1x128xf32, #tpu.memory_space<any>>) dst(%95 : memref<1x128xf32, #tpu.memory_space<vmem>>)
    } else {
    }
    %c0_18 = arith.constant 0 : index
    %c0_19 = arith.constant 0 : index
    %c0_20 = arith.constant 0 : index
    %37 = vector.load %arg5[%c0_18, %c0_19, %c0_20] : memref<2x1x128xf32, #tpu.memory_space<vmem>>, vector<1x1x128xf32>
    %38 = vector.shape_cast %37 : vector<1x1x128xf32> to vector<1x128xf32>
    %39 = tpu.iota {dimensions = array<i32: 1>} : vector<1x128xi32>
    %c0_i32_21 = arith.constant 0 : i32
    %40 = vector.broadcast %c0_i32_21 : i32 to vector<1x128xi32>
    %41 = arith.cmpi eq, %39, %40 : vector<1x128xi32>
    %c1_i32_22 = arith.constant 1 : i32
    %42 = tpu.dynamic_rotate %38 by %c1_i32_22 dim 1 : vector<1x128xf32>, i32 -> vector<1x128xf32>
    %cst_23 = arith.constant 0.000000e+00 : f32
    %43 = vector.broadcast %cst_23 : f32 to vector<1x128xf32>
    %44 = arith.select %41, %43, %42 : vector<1x128xi1>, vector<1x128xf32>
    %c127_i32_24 = arith.constant 127 : i32
    %45 = vector.broadcast %c127_i32_24 : i32 to vector<1x128xi32>
    %46 = arith.cmpi eq, %39, %45 : vector<1x128xi32>
    %c127_i32_25 = arith.constant 127 : i32
    %47 = tpu.dynamic_rotate %38 by %c127_i32_25 dim 1 : vector<1x128xf32>, i32 -> vector<1x128xf32>
    %cst_26 = arith.constant 0.000000e+00 : f32
    %48 = vector.broadcast %cst_26 : f32 to vector<1x128xf32>
    %49 = arith.select %46, %48, %47 : vector<1x128xi1>, vector<1x128xf32>
    %cst_27 = arith.constant 2.000000e+00 : f32
    %50 = vector.broadcast %cst_27 : f32 to vector<1x128xf32>
    %51 = arith.mulf %50, %38 : vector<1x128xf32>
    %52 = arith.addf %44, %51 : vector<1x128xf32>
    %53 = arith.addf %52, %49 : vector<1x128xf32>
    %54 = arith.subf %44, %49 : vector<1x128xf32>
    %c1 = arith.constant 1 : index
    %c0_28 = arith.constant 0 : index
    %c0_29 = arith.constant 0 : index
    %55 = vector.load %arg5[%c1, %c0_28, %c0_29] : memref<2x1x128xf32, #tpu.memory_space<vmem>>, vector<1x1x128xf32>
    %56 = vector.shape_cast %55 : vector<1x1x128xf32> to vector<1x128xf32>
    %57 = tpu.iota {dimensions = array<i32: 1>} : vector<1x128xi32>
    %c0_i32_30 = arith.constant 0 : i32
    %58 = vector.broadcast %c0_i32_30 : i32 to vector<1x128xi32>
    %59 = arith.cmpi eq, %57, %58 : vector<1x128xi32>
    %c1_i32_31 = arith.constant 1 : i32
    %60 = tpu.dynamic_rotate %56 by %c1_i32_31 dim 1 : vector<1x128xf32>, i32 -> vector<1x128xf32>
    %cst_32 = arith.constant 0.000000e+00 : f32
    %61 = vector.broadcast %cst_32 : f32 to vector<1x128xf32>
    %62 = arith.select %59, %61, %60 : vector<1x128xi1>, vector<1x128xf32>
    %c127_i32_33 = arith.constant 127 : i32
    %63 = vector.broadcast %c127_i32_33 : i32 to vector<1x128xi32>
    %64 = arith.cmpi eq, %57, %63 : vector<1x128xi32>
    %c127_i32_34 = arith.constant 127 : i32
    %65 = tpu.dynamic_rotate %56 by %c127_i32_34 dim 1 : vector<1x128xf32>, i32 -> vector<1x128xf32>
    %cst_35 = arith.constant 0.000000e+00 : f32
    %66 = vector.broadcast %cst_35 : f32 to vector<1x128xf32>
    %67 = arith.select %64, %66, %65 : vector<1x128xi1>, vector<1x128xf32>
    %cst_36 = arith.constant 2.000000e+00 : f32
    %68 = vector.broadcast %cst_36 : f32 to vector<1x128xf32>
    %69 = arith.mulf %68, %56 : vector<1x128xf32>
    %70 = arith.addf %62, %69 : vector<1x128xf32>
    %71 = arith.addf %70, %67 : vector<1x128xf32>
    %72 = arith.subf %62, %67 : vector<1x128xf32>
    %73 = tpu.concatenate %53, %29, %71 in 0 : vector<1x128xf32>, vector<128x128xf32>, vector<1x128xf32> -> vector<130x128xf32>
    %74 = tpu.concatenate %54, %30, %72 in 0 : vector<1x128xf32>, vector<128x128xf32>, vector<1x128xf32> -> vector<130x128xf32>
    %75 = vector.extract_strided_slice %74 {offsets = [0, 0], sizes = [128, 128], strides = [1, 1]} : vector<130x128xf32> to vector<128x128xf32>
    %76 = vector.extract_strided_slice %74 {offsets = [1, 0], sizes = [128, 128], strides = [1, 1]} : vector<130x128xf32> to vector<128x128xf32>
    %cst_37 = arith.constant 2.000000e+00 : f32
    %77 = vector.broadcast %cst_37 : f32 to vector<128x128xf32>
    %78 = arith.mulf %77, %76 : vector<128x128xf32>
    %79 = arith.addf %75, %78 : vector<128x128xf32>
    %80 = vector.extract_strided_slice %74 {offsets = [2, 0], sizes = [128, 128], strides = [1, 1]} : vector<130x128xf32> to vector<128x128xf32>
    %81 = arith.addf %79, %80 : vector<128x128xf32>
    %82 = vector.extract_strided_slice %73 {offsets = [0, 0], sizes = [128, 128], strides = [1, 1]} : vector<130x128xf32> to vector<128x128xf32>
    %83 = vector.extract_strided_slice %73 {offsets = [2, 0], sizes = [128, 128], strides = [1, 1]} : vector<130x128xf32> to vector<128x128xf32>
    %84 = arith.subf %82, %83 : vector<128x128xf32>
    %c0_38 = arith.constant 0 : index
    %c0_39 = arith.constant 0 : index
    %c0_40 = arith.constant 0 : index
    %c0_41 = arith.constant 0 : index
    %85 = vector.load %arg4[%c0_38, %c0_39, %c0_40, %c0_41] : memref<1x2x128x128xf32, #tpu.memory_space<vmem>>, vector<1x1x128x128xf32>
    %86 = vector.shape_cast %85 : vector<1x1x128x128xf32> to vector<128x128xf32>
    %87 = vector.shape_cast %81 : vector<128x128xf32> to vector<1x1x128x128xf32>
    tpu.vector_store %arg4[%c0_38, %c0_39, %c0_40, %c0_41], %87 {strides = array<i32>} : memref<1x2x128x128xf32, #tpu.memory_space<vmem>>, vector<1x1x128x128xf32>,
    %c0_42 = arith.constant 0 : index
    %c1_43 = arith.constant 1 : index
    %c0_44 = arith.constant 0 : index
    %c0_45 = arith.constant 0 : index
    %88 = vector.load %arg4[%c0_42, %c1_43, %c0_44, %c0_45] : memref<1x2x128x128xf32, #tpu.memory_space<vmem>>, vector<1x1x128x128xf32>
    %89 = vector.shape_cast %88 : vector<1x1x128x128xf32> to vector<128x128xf32>
    %90 = vector.shape_cast %84 : vector<128x128xf32> to vector<1x1x128x128xf32>
    tpu.vector_store %arg4[%c0_42, %c1_43, %c0_44, %c0_45], %90 {strides = array<i32>} : memref<1x2x128x128xf32, #tpu.memory_space<vmem>>, vector<1x1x128x128xf32>,
    return
  }
  func.func @transform_0(%arg0: i32, %arg1: i32) -> (i32, i32, i32, i32) {
    %c0_i32 = arith.constant 0 : i32
    %c0_i32_0 = arith.constant 0 : i32
    %c0_i32_1 = arith.constant 0 : i32
    return %arg0, %c0_i32, %arg1, %c0_i32_0 : i32, i32, i32, i32
  }
  func.func @transform_2(%arg0: i32, %arg1: i32) -> (i32, i32, i32, i32) {
    %c0_i32 = arith.constant 0 : i32
    %c0_i32_0 = arith.constant 0 : i32
    %c0_i32_1 = arith.constant 0 : i32
    return %arg0, %c0_i32, %arg1, %c0_i32_0 : i32, i32, i32, i32
  }
}

</mosaic_0001>

<llo_original>
// kernel: tpu_custom_call.1
$region0: #{tpu_custom_call.1}
  #allocation0 [shape = 'u32[]', space=smem, size = 0x4, offset = 0x4, fixed_abs, tag = 'smem constant byte address 0x4 - core index']
  #allocation1 [shape = 'u32[144,128]{1,0:T(1,128)}', space=vmem, size = 0x12000, scoped, tag = 'internal scratch']
  #allocation2 [shape = 'f32[2,1,128]{2,1,0:T(1,128)}', space=vmem, size = 0x400, scoped, tag = 'scratch operand']
  #allocation3 [shape = 's32[2]{0}', space=sflag, size = 0x8, scoped, tag = 'scratch operand']
  #allocation8 [shape = 's32[]', space=sflag, size = 0x4, offset = 0, fixed_abs, tag = 'sflag constant byte address 0x0 - dummy sync flag']
  #allocation9 [shape = 's32[]', space=sflag, size = 0x4, offset = 0, fixed_abs, tag = 'sflag constant byte address 0x0 - dummy sync flag']
  #allocation10 [shape = 'u32[]', space=smem, size = 0x4, offset = 0x44, fixed_abs, tag = 'smem constant byte address 0x44 - assertion arg 0']
  #allocation11 [shape = 'u32[]', space=smem, size = 0x4, offset = 0x48, fixed_abs, tag = 'smem constant byte address 0x48 - assertion arg 1']
  #allocation12 [shape = 's32[]', space=sflag, size = 0x4, offset = 0, fixed_abs, tag = 'sflag constant byte address 0x0 - dummy sync flag']
  #allocation13 [shape = 's32[]', space=sflag, size = 0x4, offset = 0, fixed_abs, tag = 'sflag constant byte address 0x0 - dummy sync flag']
  %s0 = inlined_call_operand.hbm [shape: f32[2,1,128,128], index: 0, kind: input, shape index: {}]
  %s1 = inlined_call_operand.hbm [shape: f32[2,1,128,128], index: 1, kind: input, shape index: {}]
  %s2 = inlined_call_operand.hbm [shape: f32[2,2,128,128], index: 2, kind: output, shape index: {}]
  %s3 = sld [smem:[#allocation0]]
  $region73: #{tpu_custom_call.1} parent=0
    _
  %s5 = ssub.s32 1, %s3
  %s6 = scalar_select 0, %s5, %s3
  $region1: #{tpu_custom_call.1} parent=0
    #allocation4 [shape = 'u8[131072]{0}', space=vmem, size = 0x20000, scoped, tag = 'input window, operand 0']
    #allocation5 [shape = 's32[2]{0}', space=sflag, size = 0x8, scoped, tag = 'scoped memory for tpu_custom_call.1']
    #allocation6 [shape = 's32[2]{0}', space=sflag, size = 0x8, scoped, tag = 'scoped memory for tpu_custom_call.1']
    #allocation7 [shape = 'u8[262144]{0}', space=vmem, size = 0x40000, scoped, tag = 'output window, operand 0']
    %7 = vsyncpa [#allocation5], 0
    %s8 = scalar_lea.sflag [#allocation5], 1
    %9 = vsyncpa %s8, 0
    %10 = vsyncpa [#allocation6], 0
    %s11 = scalar_lea.sflag [#allocation6], 1
    %12 = vsyncpa %s11, 0
    loop: start=0, step=1, limit=4
    $region2: #{tpu_custom_call.1} parent=1 // loop_pre_header
      _
    $region3: #{tpu_custom_call.1} parent=1 // loop_header
      %s14 = sphi 0, %s18
      %p15 = scmp.ge.s32.totalorder %s14, 4
      %s21 = sphi 0, %s33
      %s22 = sphi 0, %s29
      %s23 = sphi 0, %s21
      %s24 = sphi 0, %s22
      %s25 = sphi 0, %s23
      %s26 = sphi 0, %s24
      %s38 = sphi 0, %s40
      %s41 = sphi 0, %s38
      %s42 = sphi 0, %s41
      %s58 = sphi 0, %s42
      %s66 = sphi 0, %s68
      %s69 = sphi 0, %s66
      %s70 = sphi 0, %s69
      %s86 = sphi 0, %s70
    $region4: #{tpu_custom_call.1} parent=1 // loop_header_branch
      %17 = sbr.rel (%p15) target = $region8
    $region5: #{tpu_custom_call.1} parent=1 // loop_body
      %s19 = ssub.s32 %s14, 1
      %s20 = ssub.s32 %s14, 2
      %s27 = sadd.s32 1, %s22
      %p28 = scmp.ge.s32.totalorder %s27, 1
      %s29 = scalar_select %p28, 0, %s27
      %s30 = sadd.s32 1, %s21
      %s31 = scalar_select %p28, %s30, %s21
      %p32 = scmp.ge.s32.totalorder %s31, 2
      %s33 = scalar_select %p32, 0, %s31
      %s34 = ssub.s32 %s21, %s33
      %s35 = ssub.s32 %s22, %s29
      %s36 = sor.u32 %s34, %s35
      %p37 = scmp.eq.s32.totalorder %s36, 0
      %s39 = sadd.s32 %s38, 1
      %s40 = scalar_select %p37, %s38, %s39
      %p43 = pneg %p37
      %p44 = scmp.eq.s32.totalorder %s14, 1
      %p45 = por %p43, %p44
      %p46 = scmp.ne.s32.totalorder %s38, %s41
      %p47 = scmp.eq.s32.totalorder %s14, 0
      %p48 = por %p46, %p47
      %p49 = scmp.ne.s32.totalorder %s38, %s41
      %p50 = scmp.eq.s32.totalorder %s19, 1
      %p51 = por %p49, %p50
      %p52 = scmp.ne.s32.totalorder %s41, %s42
      %p53 = scmp.eq.s32.totalorder %s19, 0
      %p54 = por %p52, %p53
      %p55 = scmp.ne.s32.totalorder %s41, %s42
      %p56 = scmp.eq.s32.totalorder %s20, 1
      %p57 = por %p55, %p56
      %p59 = scmp.ne.s32.totalorder %s42, %s58
      %p60 = scmp.eq.s32.totalorder %s20, 0
      %p61 = por %p59, %p60
      %s62 = ssub.s32 %s21, %s33
      %s63 = ssub.s32 %s22, %s29
      %s64 = sor.u32 %s62, %s63
      %p65 = scmp.eq.s32.totalorder %s64, 0
      %s67 = sadd.s32 %s66, 1
      %s68 = scalar_select %p65, %s66, %s67
      %p71 = pneg %p65
      %p72 = scmp.eq.s32.totalorder %s14, 1
      %p73 = por %p71, %p72
      %p74 = scmp.ne.s32.totalorder %s66, %s69
      %p75 = scmp.eq.s32.totalorder %s14, 0
      %p76 = por %p74, %p75
      %p77 = scmp.ne.s32.totalorder %s66, %s69
      %p78 = scmp.eq.s32.totalorder %s19, 1
      %p79 = por %p77, %p78
      %p80 = scmp.ne.s32.totalorder %s69, %s70
      %p81 = scmp.eq.s32.totalorder %s19, 0
      %p82 = por %p80, %p81
      %p83 = scmp.ne.s32.totalorder %s69, %s70
      %p84 = scmp.eq.s32.totalorder %s20, 1
      %p85 = por %p83, %p84
      %p87 = scmp.ne.s32.totalorder %s70, %s86
      %p88 = scmp.eq.s32.totalorder %s20, 0
      %p89 = por %p87, %p88
      %p90 = scmp.le.s32.totalorder 1, %s14
      %p91 = scmp.lt.s32.totalorder %s14, 3
      %p92 = pnand %p90, %p91
      %p93 = pneg %p92
      // Predicated region
      $region9: #{tpu_custom_call.1} parent=5 // pred_check
        _
      $region10: #{tpu_custom_call.1} parent=5 // pred_check_branch
        %95 = sbr.rel (%p92) target = $region12
      $region11: #{tpu_custom_call.1} parent=5 // pred_region
        %s96 = ssub.s32 %s14, 1
      $region12: #{tpu_custom_call.1} parent=5 // pred_fallthru
        _
      %p97 = scmp.lt.s32.totalorder %s14, 2
      // Predicated region
      $region13: #{tpu_custom_call.1} parent=5 // pred_check
        %p98 = pneg %p97
      $region14: #{tpu_custom_call.1} parent=5 // pred_check_branch
        %100 = sbr.rel (%p98) target = $region16
      $region15: #{tpu_custom_call.1} parent=5 // pred_region
        // Predicated region
        $region17: #{tpu_custom_call.1} parent=15 // pred_check
          %p101 = pneg %p48
        $region18: #{tpu_custom_call.1} parent=15 // pred_check_branch
          %103 = sbr.rel (%p101) target = $region20
        $region19: #{tpu_custom_call.1} parent=15 // pred_region
          %s104 = sand.u32 %s38, 1
          %s105 = scalar_lea.sflag [#allocation5], %s104
          %s106 = sand.u32 %s38, 1
          %s107 = smul.addr %s106, 128
          %s108 = scalar_lea.vmem [#allocation4], %s107
          %s109 = smul.u32 16, %s22
          %s111 = ssub.s32 2048, 2048
          %112 = vsyncadd %s105, %s111
          %s113 = smul.addr %s21, 16
          %s114 = sadd.s32 %s109, %s113
          %s115 = smul.addr %s114, 128
          %s116 = scalar_lea.hbm %s0, %s115
          %s117 = sshll.u32 %s108, 4
          %s118 = int_to_ptr.vmem [resolvable:$true] %s117
          %123 = dma.hbm_to_vmem [thread:$0]  %s116, 2048, %s118, %s105, 128, 128, 8
        $region20: #{tpu_custom_call.1} parent=15 // pred_fallthru
          _
      $region16: #{tpu_custom_call.1} parent=5 // pred_fallthru
        _
      %p124 = scmp.le.s32.totalorder 1, %s14
      %p125 = scmp.lt.s32.totalorder %s14, 3
      %p126 = pnand %p124, %p125
      %p127 = pneg %p126
      // Predicated region
      $region21: #{tpu_custom_call.1} parent=5 // pred_check
        _
      $region22: #{tpu_custom_call.1} parent=5 // pred_check_branch
        %129 = sbr.rel (%p126) target = $region24
      $region23: #{tpu_custom_call.1} parent=5 // pred_region
        %s130 = ssub.s32 %s14, 1
        %s131 = sand.u32 %s41, 1
        %s132 = scalar_lea.sflag [#allocation5], %s131
        %s133 = sand.u32 %s41, 1
        %s134 = smul.addr %s133, 128
        %s135 = scalar_lea.vmem [#allocation4], %s134
        // Predicated region
        $region25: #{tpu_custom_call.1} parent=23 // pred_check
          %p136 = pneg %p54
        $region26: #{tpu_custom_call.1} parent=23 // pred_check_branch
          %138 = sbr.rel (%p136) target = $region28
        $region27: #{tpu_custom_call.1} parent=23 // pred_region
          %139 = dma.done %s132, 2048
        $region28: #{tpu_custom_call.1} parent=23 // pred_fallthru
          _
        %s140 = sand.u32 %s41, 1
        %s141 = scalar_lea.sflag [#allocation5], %s140
        %s142 = sand.u32 %s41, 1
        %s143 = smul.addr %s142, 128
        %s144 = scalar_lea.vmem [#allocation4], %s143
        %p145 = pneg %p54
        %p146 = pneg %p51
        %p147 = pneg %p82
        %p148 = pneg %p79
        %s149 = sand.u32 %s69, 1
        %s150 = scalar_lea.sflag [#allocation6], %s149
        %s151 = sand.u32 %s69, 1
        %s152 = smul.addr %s151, 256
        %s153 = scalar_lea.vmem [#allocation7], %s152
        %s154 = smul.u32 16, %s24
        %s155 = smul.u32 16, %s24
        %s156 = smul.u32 %s24, 128
        %p157 = scmp.gt.s32.totalorder %s24, 0
        // Predicated region
        $region29: #{tpu_custom_call.1} parent=23 // pred_check
          %p158 = pneg %p157
        $region30: #{tpu_custom_call.1} parent=23 // pred_check_branch
          %160 = sbr.rel (%p158) target = $region32
        $region31: #{tpu_custom_call.1} parent=23 // pred_region
          %s161 = ssub.s32 %s156, 1
          %s162 = smul.u32 %s23, 128
          %s163 = sadd.s32 %s161, %s162
          %s164 = smul.addr %s163, 16
          %s165 = scalar_lea.hbm %s1, %s164
          // Predicated region
          $region33: #{tpu_custom_call.1} parent=31 // pred_check
            _
          $region34: #{tpu_custom_call.1} parent=31 // pred_check_branch
            %167 = sbr.rel target = $region36
          $region35: #{tpu_custom_call.1} parent=31 // pred_region
            %168 = sst [smem:[#allocation10]] [#allocation9]
            %169 = sst [smem:[#allocation11]] [#allocation8]
          $region36: #{tpu_custom_call.1} parent=31 // pred_fallthru
            _
          %171 = shalt.err (0)
          %s173 = sshll.u32 [#allocation2], 4
          %s174 = int_to_ptr.vmem [resolvable:$true] %s173
          %176 = dma.hbm_to_vmem [thread:$0]  %s165, 16, %s174, [#allocation3]
        $region32: #{tpu_custom_call.1} parent=23 // pred_fallthru
          _
        %p177 = scmp.eq.s32.totalorder %s24, 0
        // Predicated region
        $region37: #{tpu_custom_call.1} parent=23 // pred_check
          %p178 = pneg %p177
        $region38: #{tpu_custom_call.1} parent=23 // pred_check_branch
          %180 = sbr.rel (%p178) target = $region40
        $region39: #{tpu_custom_call.1} parent=23 // pred_region
          %181 = vst [vmem:[#allocation2] sm:$0x1] 0.0
        $region40: #{tpu_custom_call.1} parent=23 // pred_fallthru
          _
        %p182 = scmp.lt.s32.totalorder %s24, 0
        // Predicated region
        $region41: #{tpu_custom_call.1} parent=23 // pred_check
          %p183 = pneg %p182
        $region42: #{tpu_custom_call.1} parent=23 // pred_check_branch
          %185 = sbr.rel (%p183) target = $region44
        $region43: #{tpu_custom_call.1} parent=23 // pred_region
          %s186 = sadd.s32 %s156, 128
          %s187 = smul.u32 %s23, 128
          %s188 = sadd.s32 %s186, %s187
          %s189 = smul.addr %s188, 16
          %s190 = scalar_lea.hbm %s1, %s189
          %s191 = scalar_lea.vmem [#allocation2], 1
          %s192 = scalar_lea.sflag [#allocation3], 1
          // Predicated region
          $region45: #{tpu_custom_call.1} parent=43 // pred_check
            _
          $region46: #{tpu_custom_call.1} parent=43 // pred_check_branch
            %194 = sbr.rel target = $region48
          $region47: #{tpu_custom_call.1} parent=43 // pred_region
            %195 = sst [smem:[#allocation10]] [#allocation13]
            %196 = sst [smem:[#allocation11]] [#allocation12]
          $region48: #{tpu_custom_call.1} parent=43 // pred_fallthru
            _
          %198 = shalt.err (0)
          %s200 = sshll.u32 %s191, 4
          %s201 = int_to_ptr.vmem [resolvable:$true] %s200
          %203 = dma.hbm_to_vmem [thread:$0]  %s190, 16, %s201, %s192
        $region44: #{tpu_custom_call.1} parent=23 // pred_fallthru
          _
        // Predicated region
        $region49: #{tpu_custom_call.1} parent=23 // pred_check
          %p204 = pneg %p177
        $region50: #{tpu_custom_call.1} parent=23 // pred_check_branch
          %206 = sbr.rel (%p204) target = $region52
        $region51: #{tpu_custom_call.1} parent=23 // pred_region
          %s207 = scalar_lea.vmem [#allocation2], 1
          %208 = vst [vmem:[%s207] sm:$0x1] 0.0
        $region52: #{tpu_custom_call.1} parent=23 // pred_fallthru
          _
        %v209 = vld [vmem:[%s135] sm:$0xff]
        %v210 = vld [vmem:[%s135 + $0x8] sm:$0xff]
        %v211 = vld [vmem:[%s135 + $0x10] sm:$0xff]
        %v212 = vld [vmem:[%s135 + $0x18] sm:$0xff]
        %v213 = vld [vmem:[%s135 + $0x20] sm:$0xff]
        %v214 = vld [vmem:[%s135 + $0x28] sm:$0xff]
        %v215 = vld [vmem:[%s135 + $0x30] sm:$0xff]
        %v216 = vld [vmem:[%s135 + $0x38] sm:$0xff]
        %v217 = vld [vmem:[%s135 + $0x40] sm:$0xff]
        %v218 = vld [vmem:[%s135 + $0x48] sm:$0xff]
        %v219 = vld [vmem:[%s135 + $0x50] sm:$0xff]
        %v220 = vld [vmem:[%s135 + $0x58] sm:$0xff]
        %v221 = vld [vmem:[%s135 + $0x60] sm:$0xff]
        %v222 = vld [vmem:[%s135 + $0x68] sm:$0xff]
        %v223 = vld [vmem:[%s135 + $0x70] sm:$0xff]
        %v224 = vld [vmem:[%s135 + $0x78] sm:$0xff]
        %v225 = vlaneseq
        %v226 = vand.u32 %v225, 127
        %vm227 = vcmp.eq.s32.totalorder %v226, 0
        %228 = vrot.lane.b32.xlu0 %v209, 1
        %v229 = vpop.permute.xlu0 %228
        %230 = vrot.lane.b32.xlu0 %v210, 1
        %v231 = vpop.permute.xlu0 %230
        %232 = vrot.lane.b32.xlu0 %v211, 1
        %v233 = vpop.permute.xlu0 %232
        %234 = vrot.lane.b32.xlu0 %v212, 1
        %v235 = vpop.permute.xlu0 %234
        %236 = vrot.lane.b32.xlu0 %v213, 1
        %v237 = vpop.permute.xlu0 %236
        %238 = vrot.lane.b32.xlu0 %v214, 1
        %v239 = vpop.permute.xlu0 %238
        %240 = vrot.lane.b32.xlu0 %v215, 1
        %v241 = vpop.permute.xlu0 %240
        %242 = vrot.lane.b32.xlu0 %v216, 1
        %v243 = vpop.permute.xlu0 %242
        %244 = vrot.lane.b32.xlu0 %v217, 1
        %v245 = vpop.permute.xlu0 %244
        %246 = vrot.lane.b32.xlu0 %v218, 1
        %v247 = vpop.permute.xlu0 %246
        %248 = vrot.lane.b32.xlu0 %v219, 1
        %v249 = vpop.permute.xlu0 %248
        %250 = vrot.lane.b32.xlu0 %v220, 1
        %v251 = vpop.permute.xlu0 %250
        %252 = vrot.lane.b32.xlu0 %v221, 1
        %v253 = vpop.permute.xlu0 %252
        %254 = vrot.lane.b32.xlu0 %v222, 1
        %v255 = vpop.permute.xlu0 %254
        %256 = vrot.lane.b32.xlu0 %v223, 1
        %v257 = vpop.permute.xlu0 %256
        %258 = vrot.lane.b32.xlu0 %v224, 1
        %v259 = vpop.permute.xlu0 %258
        %v260 = vsel %vm227, 0.0, %v229
        %v261 = vsel %vm227, 0.0, %v231
        %v262 = vsel %vm227, 0.0, %v233
        %v263 = vsel %vm227, 0.0, %v235
        %v264 = vsel %vm227, 0.0, %v237
        %v265 = vsel %vm227, 0.0, %v239
        %v266 = vsel %vm227, 0.0, %v241
        %v267 = vsel %vm227, 0.0, %v243
        %v268 = vsel %vm227, 0.0, %v245
        %v269 = vsel %vm227, 0.0, %v247
        %v270 = vsel %vm227, 0.0, %v249
        %v271 = vsel %vm227, 0.0, %v251
        %v272 = vsel %vm227, 0.0, %v253
        %v273 = vsel %vm227, 0.0, %v255
        %v274 = vsel %vm227, 0.0, %v257
        %v275 = vsel %vm227, 0.0, %v259
        %vm276 = vcmp.eq.s32.totalorder %v226, 127
        %277 = vrot.lane.b32.xlu0 %v209, 127
        %v278 = vpop.permute.xlu0 %277
        %279 = vrot.lane.b32.xlu0 %v210, 127
        %v280 = vpop.permute.xlu0 %279
        %281 = vrot.lane.b32.xlu0 %v211, 127
        %v282 = vpop.permute.xlu0 %281
        %283 = vrot.lane.b32.xlu0 %v212, 127
        %v284 = vpop.permute.xlu0 %283
        %285 = vrot.lane.b32.xlu0 %v213, 127
        %v286 = vpop.permute.xlu0 %285
        %287 = vrot.lane.b32.xlu0 %v214, 127
        %v288 = vpop.permute.xlu0 %287
        %289 = vrot.lane.b32.xlu0 %v215, 127
        %v290 = vpop.permute.xlu0 %289
        %291 = vrot.lane.b32.xlu0 %v216, 127
        %v292 = vpop.permute.xlu0 %291
        %293 = vrot.lane.b32.xlu0 %v217, 127
        %v294 = vpop.permute.xlu0 %293
        %295 = vrot.lane.b32.xlu0 %v218, 127
        %v296 = vpop.permute.xlu0 %295
        %297 = vrot.lane.b32.xlu0 %v219, 127
        %v298 = vpop.permute.xlu0 %297
        %299 = vrot.lane.b32.xlu0 %v220, 127
        %v300 = vpop.permute.xlu0 %299
        %301 = vrot.lane.b32.xlu0 %v221, 127
        %v302 = vpop.permute.xlu0 %301
        %303 = vrot.lane.b32.xlu0 %v222, 127
        %v304 = vpop.permute.xlu0 %303
        %305 = vrot.lane.b32.xlu0 %v223, 127
        %v306 = vpop.permute.xlu0 %305
        %307 = vrot.lane.b32.xlu0 %v224, 127
        %v308 = vpop.permute.xlu0 %307
        %v309 = vsel %vm276, 0.0, %v278
        %v310 = vsel %vm276, 0.0, %v280
        %v311 = vsel %vm276, 0.0, %v282
        %v312 = vsel %vm276, 0.0, %v284
        %v313 = vsel %vm276, 0.0, %v286
        %v314 = vsel %vm276, 0.0, %v288
        %v315 = vsel %vm276, 0.0, %v290
        %v316 = vsel %vm276, 0.0, %v292
        %v317 = vsel %vm276, 0.0, %v294
        %v318 = vsel %vm276, 0.0, %v296
        %v319 = vsel %vm276, 0.0, %v298
        %v320 = vsel %vm276, 0.0, %v300
        %v321 = vsel %vm276, 0.0, %v302
        %v322 = vsel %vm276, 0.0, %v304
        %v323 = vsel %vm276, 0.0, %v306
        %v324 = vsel %vm276, 0.0, %v308
        %v325 = vmul.f32 %v209, 2.0
        %v326 = vmul.f32 %v210, 2.0
        %v327 = vmul.f32 %v211, 2.0
        %v328 = vmul.f32 %v212, 2.0
        %v329 = vmul.f32 %v213, 2.0
        %v330 = vmul.f32 %v214, 2.0
        %v331 = vmul.f32 %v215, 2.0
        %v332 = vmul.f32 %v216, 2.0
        %v333 = vmul.f32 %v217, 2.0
        %v334 = vmul.f32 %v218, 2.0
        %v335 = vmul.f32 %v219, 2.0
        %v336 = vmul.f32 %v220, 2.0
        %v337 = vmul.f32 %v221, 2.0
        %v338 = vmul.f32 %v222, 2.0
        %v339 = vmul.f32 %v223, 2.0
        %v340 = vmul.f32 %v224, 2.0
        %v341 = vadd.f32 %v260, %v325
        %v342 = vadd.f32 %v261, %v326
        %v343 = vadd.f32 %v262, %v327
        %v344 = vadd.f32 %v263, %v328
        %v345 = vadd.f32 %v264, %v329
        %v346 = vadd.f32 %v265, %v330
        %v347 = vadd.f32 %v266, %v331
        %v348 = vadd.f32 %v267, %v332
        %v349 = vadd.f32 %v268, %v333
        %v350 = vadd.f32 %v269, %v334
        %v351 = vadd.f32 %v270, %v335
        %v352 = vadd.f32 %v271, %v336
        %v353 = vadd.f32 %v272, %v337
        %v354 = vadd.f32 %v273, %v338
        %v355 = vadd.f32 %v274, %v339
        %v356 = vadd.f32 %v275, %v340
        %v357 = vadd.f32 %v341, %v309
        %v358 = vadd.f32 %v342, %v310
        %v359 = vadd.f32 %v343, %v311
        %v360 = vadd.f32 %v344, %v312
        %v361 = vadd.f32 %v345, %v313
        %v362 = vadd.f32 %v346, %v314
        %v363 = vadd.f32 %v347, %v315
        %v364 = vadd.f32 %v348, %v316
        %v365 = vadd.f32 %v349, %v317
        %v366 = vadd.f32 %v350, %v318
        %v367 = vadd.f32 %v351, %v319
        %v368 = vadd.f32 %v352, %v320
        %v369 = vadd.f32 %v353, %v321
        %v370 = vadd.f32 %v354, %v322
        %v371 = vadd.f32 %v355, %v323
        %v372 = vadd.f32 %v356, %v324
        %v373 = vsub.f32 %v260, %v309
        %v374 = vsub.f32 %v261, %v310
        %v375 = vsub.f32 %v262, %v311
        %v376 = vsub.f32 %v263, %v312
        %v377 = vsub.f32 %v264, %v313
        %v378 = vsub.f32 %v265, %v314
        %v379 = vsub.f32 %v266, %v315
        %v380 = vsub.f32 %v267, %v316
        %v381 = vsub.f32 %v268, %v317
        %v382 = vsub.f32 %v269, %v318
        %v383 = vsub.f32 %v270, %v319
        %v384 = vsub.f32 %v271, %v320
        %v385 = vsub.f32 %v272, %v321
        %v386 = vsub.f32 %v273, %v322
        %v387 = vsub.f32 %v274, %v323
        %v388 = vsub.f32 %v275, %v324
        // Predicated region
        $region53: #{tpu_custom_call.1} parent=23 // pred_check
          %p389 = pneg %p157
        $region54: #{tpu_custom_call.1} parent=23 // pred_check_branch
          %391 = sbr.rel (%p389) target = $region56
        $region55: #{tpu_custom_call.1} parent=23 // pred_region
          %s392 = smul.u32 1, 1
          %s393 = sshll.u32 %s392, 4
          %394 = dma.done [#allocation3], %s393
        $region56: #{tpu_custom_call.1} parent=23 // pred_fallthru
          _
        // Predicated region
        $region57: #{tpu_custom_call.1} parent=23 // pred_check
          %p395 = pneg %p182
        $region58: #{tpu_custom_call.1} parent=23 // pred_check_branch
          %397 = sbr.rel (%p395) target = $region60
        $region59: #{tpu_custom_call.1} parent=23 // pred_region
          %s398 = scalar_lea.sflag [#allocation3], 1
          %s399 = smul.u32 1, 1
          %s400 = sshll.u32 %s399, 4
          %401 = dma.done %s398, %s400
        $region60: #{tpu_custom_call.1} parent=23 // pred_fallthru
          _
        %v402 = vld [vmem:[#allocation2] sm:$0x1]
        %403 = vrot.lane.b32.xlu0 %v402, 1
        %v404 = vpop.permute.xlu0 %403
        %v405 = vsel %vm227, 0.0, %v404
        %406 = vrot.lane.b32.xlu0 %v402, 127
        %v407 = vpop.permute.xlu0 %406
        %v408 = vsel %vm276, 0.0, %v407
        %v409 = vmul.f32 %v402, 2.0
        %v410 = vadd.f32 %v405, %v409
        %v411 = vadd.f32 %v410, %v408
        %v412 = vsub.f32 %v405, %v408
        %s413 = scalar_lea.vmem [#allocation2], 1
        %v414 = vld [vmem:[%s413] sm:$0x1]
        %415 = vrot.lane.b32.xlu0 %v414, 1
        %v416 = vpop.permute.xlu0 %415
        %v417 = vsel %vm227, 0.0, %v416
        %418 = vrot.lane.b32.xlu0 %v414, 127
        %v419 = vpop.permute.xlu0 %418
        %v420 = vsel %vm276, 0.0, %v419
        %v421 = vmul.f32 %v414, 2.0
        %v422 = vadd.f32 %v417, %v421
        %v423 = vadd.f32 %v422, %v420
        %v424 = vsub.f32 %v417, %v420
        %vm441 = vcmask 1040384
        %v442 = vrot.slane %v357, 7
        %v443 = vrot.slane %v358, 7
        %v444 = vsel %vm441, %v442, %v443
        %v445 = vrot.slane %v359, 7
        %v446 = vsel %vm441, %v443, %v445
        %v447 = vrot.slane %v360, 7
        %v448 = vsel %vm441, %v445, %v447
        %v449 = vrot.slane %v361, 7
        %v450 = vsel %vm441, %v447, %v449
        %v451 = vrot.slane %v362, 7
        %v452 = vsel %vm441, %v449, %v451
        %v453 = vrot.slane %v363, 7
        %v454 = vsel %vm441, %v451, %v453
        %v455 = vrot.slane %v364, 7
        %v456 = vsel %vm441, %v453, %v455
        %v457 = vrot.slane %v365, 7
        %v458 = vsel %vm441, %v455, %v457
        %v459 = vrot.slane %v366, 7
        %v460 = vsel %vm441, %v457, %v459
        %v461 = vrot.slane %v367, 7
        %v462 = vsel %vm441, %v459, %v461
        %v463 = vrot.slane %v368, 7
        %v464 = vsel %vm441, %v461, %v463
        %v465 = vrot.slane %v369, 7
        %v466 = vsel %vm441, %v463, %v465
        %v467 = vrot.slane %v370, 7
        %v468 = vsel %vm441, %v465, %v467
        %v469 = vrot.slane %v371, 7
        %v470 = vsel %vm441, %v467, %v469
        %v471 = vrot.slane %v372, 7
        %v472 = vsel %vm441, %v469, %v471
        %v491 = vrot.slane %v423, 7
        %v493 = vsel %vm441, %v411, %v442
        %v494 = vsel %vm441, %v471, %v491
        %v511 = vrot.slane %v373, 7
        %v512 = vrot.slane %v374, 7
        %v513 = vsel %vm441, %v511, %v512
        %v514 = vrot.slane %v375, 7
        %v515 = vsel %vm441, %v512, %v514
        %v516 = vrot.slane %v376, 7
        %v517 = vsel %vm441, %v514, %v516
        %v518 = vrot.slane %v377, 7
        %v519 = vsel %vm441, %v516, %v518
        %v520 = vrot.slane %v378, 7
        %v521 = vsel %vm441, %v518, %v520
        %v522 = vrot.slane %v379, 7
        %v523 = vsel %vm441, %v520, %v522
        %v524 = vrot.slane %v380, 7
        %v525 = vsel %vm441, %v522, %v524
        %v526 = vrot.slane %v381, 7
        %v527 = vsel %vm441, %v524, %v526
        %v528 = vrot.slane %v382, 7
        %v529 = vsel %vm441, %v526, %v528
        %v530 = vrot.slane %v383, 7
        %v531 = vsel %vm441, %v528, %v530
        %v532 = vrot.slane %v384, 7
        %v533 = vsel %vm441, %v530, %v532
        %v534 = vrot.slane %v385, 7
        %v535 = vsel %vm441, %v532, %v534
        %v536 = vrot.slane %v386, 7
        %v537 = vsel %vm441, %v534, %v536
        %v538 = vrot.slane %v387, 7
        %v539 = vsel %vm441, %v536, %v538
        %v540 = vrot.slane %v388, 7
        %v541 = vsel %vm441, %v538, %v540
        %v560 = vrot.slane %v424, 7
        %v562 = vsel %vm441, %v412, %v511
        %v563 = vsel %vm441, %v540, %v560
        %v564 = vmul.f32 %v562, 2.0
        %v565 = vmul.f32 %v513, 2.0
        %v566 = vmul.f32 %v515, 2.0
        %v567 = vmul.f32 %v517, 2.0
        %v568 = vmul.f32 %v519, 2.0
        %v569 = vmul.f32 %v521, 2.0
        %v570 = vmul.f32 %v523, 2.0
        %v571 = vmul.f32 %v525, 2.0
        %v572 = vmul.f32 %v527, 2.0
        %v573 = vmul.f32 %v529, 2.0
        %v574 = vmul.f32 %v531, 2.0
        %v575 = vmul.f32 %v533, 2.0
        %v576 = vmul.f32 %v535, 2.0
        %v577 = vmul.f32 %v537, 2.0
        %v578 = vmul.f32 %v539, 2.0
        %v579 = vmul.f32 %v541, 2.0
        %v580 = vmul.f32 %v563, 2.0
        %vm598 = vcmask 1046528
        %v599 = vrot.slane %v564, 1
        %v600 = vrot.slane %v565, 1
        %v601 = vsel %vm598, %v599, %v600
        %v602 = vrot.slane %v566, 1
        %v603 = vsel %vm598, %v600, %v602
        %v604 = vrot.slane %v567, 1
        %v605 = vsel %vm598, %v602, %v604
        %v606 = vrot.slane %v568, 1
        %v607 = vsel %vm598, %v604, %v606
        %v608 = vrot.slane %v569, 1
        %v609 = vsel %vm598, %v606, %v608
        %v610 = vrot.slane %v570, 1
        %v611 = vsel %vm598, %v608, %v610
        %v612 = vrot.slane %v571, 1
        %v613 = vsel %vm598, %v610, %v612
        %v614 = vrot.slane %v572, 1
        %v615 = vsel %vm598, %v612, %v614
        %v616 = vrot.slane %v573, 1
        %v617 = vsel %vm598, %v614, %v616
        %v618 = vrot.slane %v574, 1
        %v619 = vsel %vm598, %v616, %v618
        %v620 = vrot.slane %v575, 1
        %v621 = vsel %vm598, %v618, %v620
        %v622 = vrot.slane %v576, 1
        %v623 = vsel %vm598, %v620, %v622
        %v624 = vrot.slane %v577, 1
        %v625 = vsel %vm598, %v622, %v624
        %v626 = vrot.slane %v578, 1
        %v627 = vsel %vm598, %v624, %v626
        %v628 = vrot.slane %v579, 1
        %v629 = vsel %vm598, %v626, %v628
        %v630 = vrot.slane %v580, 1
        %v631 = vsel %vm598, %v628, %v630
        %v648 = vadd.f32 %v562, %v601
        %v649 = vadd.f32 %v513, %v603
        %v650 = vadd.f32 %v515, %v605
        %v651 = vadd.f32 %v517, %v607
        %v652 = vadd.f32 %v519, %v609
        %v653 = vadd.f32 %v521, %v611
        %v654 = vadd.f32 %v523, %v613
        %v655 = vadd.f32 %v525, %v615
        %v656 = vadd.f32 %v527, %v617
        %v657 = vadd.f32 %v529, %v619
        %v658 = vadd.f32 %v531, %v621
        %v659 = vadd.f32 %v533, %v623
        %v660 = vadd.f32 %v535, %v625
        %v661 = vadd.f32 %v537, %v627
        %v662 = vadd.f32 %v539, %v629
        %v663 = vadd.f32 %v541, %v631
        %vm666 = vcmask 1045504
        %v667 = vrot.slane %v562, 2
        %v668 = vrot.slane %v513, 2
        %v669 = vsel %vm666, %v667, %v668
        %v670 = vrot.slane %v515, 2
        %v671 = vsel %vm666, %v668, %v670
        %v672 = vrot.slane %v517, 2
        %v673 = vsel %vm666, %v670, %v672
        %v674 = vrot.slane %v519, 2
        %v675 = vsel %vm666, %v672, %v674
        %v676 = vrot.slane %v521, 2
        %v677 = vsel %vm666, %v674, %v676
        %v678 = vrot.slane %v523, 2
        %v679 = vsel %vm666, %v676, %v678
        %v680 = vrot.slane %v525, 2
        %v681 = vsel %vm666, %v678, %v680
        %v682 = vrot.slane %v527, 2
        %v683 = vsel %vm666, %v680, %v682
        %v684 = vrot.slane %v529, 2
        %v685 = vsel %vm666, %v682, %v684
        %v686 = vrot.slane %v531, 2
        %v687 = vsel %vm666, %v684, %v686
        %v688 = vrot.slane %v533, 2
        %v689 = vsel %vm666, %v686, %v688
        %v690 = vrot.slane %v535, 2
        %v691 = vsel %vm666, %v688, %v690
        %v692 = vrot.slane %v537, 2
        %v693 = vsel %vm666, %v690, %v692
        %v694 = vrot.slane %v539, 2
        %v695 = vsel %vm666, %v692, %v694
        %v696 = vrot.slane %v541, 2
        %v697 = vsel %vm666, %v694, %v696
        %v698 = vrot.slane %v563, 2
        %v699 = vsel %vm666, %v696, %v698
        %v716 = vadd.f32 %v648, %v669
        %v717 = vadd.f32 %v649, %v671
        %v718 = vadd.f32 %v650, %v673
        %v719 = vadd.f32 %v651, %v675
        %v720 = vadd.f32 %v652, %v677
        %v721 = vadd.f32 %v653, %v679
        %v722 = vadd.f32 %v654, %v681
        %v723 = vadd.f32 %v655, %v683
        %v724 = vadd.f32 %v656, %v685
        %v725 = vadd.f32 %v657, %v687
        %v726 = vadd.f32 %v658, %v689
        %v727 = vadd.f32 %v659, %v691
        %v728 = vadd.f32 %v660, %v693
        %v729 = vadd.f32 %v661, %v695
        %v730 = vadd.f32 %v662, %v697
        %v731 = vadd.f32 %v663, %v699
        %v734 = vrot.slane %v493, 2
        %v735 = vrot.slane %v444, 2
        %v736 = vsel %vm666, %v734, %v735
        %v737 = vrot.slane %v446, 2
        %v738 = vsel %vm666, %v735, %v737
        %v739 = vrot.slane %v448, 2
        %v740 = vsel %vm666, %v737, %v739
        %v741 = vrot.slane %v450, 2
        %v742 = vsel %vm666, %v739, %v741
        %v743 = vrot.slane %v452, 2
        %v744 = vsel %vm666, %v741, %v743
        %v745 = vrot.slane %v454, 2
        %v746 = vsel %vm666, %v743, %v745
        %v747 = vrot.slane %v456, 2
        %v748 = vsel %vm666, %v745, %v747
        %v749 = vrot.slane %v458, 2
        %v750 = vsel %vm666, %v747, %v749
        %v751 = vrot.slane %v460, 2
        %v752 = vsel %vm666, %v749, %v751
        %v753 = vrot.slane %v462, 2
        %v754 = vsel %vm666, %v751, %v753
        %v755 = vrot.slane %v464, 2
        %v756 = vsel %vm666, %v753, %v755
        %v757 = vrot.slane %v466, 2
        %v758 = vsel %vm666, %v755, %v757
        %v759 = vrot.slane %v468, 2
        %v760 = vsel %vm666, %v757, %v759
        %v761 = vrot.slane %v470, 2
        %v762 = vsel %vm666, %v759, %v761
        %v763 = vrot.slane %v472, 2
        %v764 = vsel %vm666, %v761, %v763
        %v765 = vrot.slane %v494, 2
        %v766 = vsel %vm666, %v763, %v765
        %v783 = vsub.f32 %v493, %v736
        %v784 = vsub.f32 %v444, %v738
        %v785 = vsub.f32 %v446, %v740
        %v786 = vsub.f32 %v448, %v742
        %v787 = vsub.f32 %v450, %v744
        %v788 = vsub.f32 %v452, %v746
        %v789 = vsub.f32 %v454, %v748
        %v790 = vsub.f32 %v456, %v750
        %v791 = vsub.f32 %v458, %v752
        %v792 = vsub.f32 %v460, %v754
        %v793 = vsub.f32 %v462, %v756
        %v794 = vsub.f32 %v464, %v758
        %v795 = vsub.f32 %v466, %v760
        %v796 = vsub.f32 %v468, %v762
        %v797 = vsub.f32 %v470, %v764
        %v798 = vsub.f32 %v472, %v766
        %799 = vst [vmem:[%s153] sm:$0xff] %v716
        %800 = vst [vmem:[%s153 + $0x8] sm:$0xff] %v717
        %801 = vst [vmem:[%s153 + $0x10] sm:$0xff] %v718
        %802 = vst [vmem:[%s153 + $0x18] sm:$0xff] %v719
        %803 = vst [vmem:[%s153 + $0x20] sm:$0xff] %v720
        %804 = vst [vmem:[%s153 + $0x28] sm:$0xff] %v721
        %805 = vst [vmem:[%s153 + $0x30] sm:$0xff] %v722
        %806 = vst [vmem:[%s153 + $0x38] sm:$0xff] %v723
        %807 = vst [vmem:[%s153 + $0x40] sm:$0xff] %v724
        %808 = vst [vmem:[%s153 + $0x48] sm:$0xff] %v725
        %809 = vst [vmem:[%s153 + $0x50] sm:$0xff] %v726
        %810 = vst [vmem:[%s153 + $0x58] sm:$0xff] %v727
        %811 = vst [vmem:[%s153 + $0x60] sm:$0xff] %v728
        %812 = vst [vmem:[%s153 + $0x68] sm:$0xff] %v729
        %813 = vst [vmem:[%s153 + $0x70] sm:$0xff] %v730
        %814 = vst [vmem:[%s153 + $0x78] sm:$0xff] %v731
        %s815 = scalar_lea.vmem %s153, 128 [#allocation7]
        %816 = vst [vmem:[%s815] sm:$0xff] %v783
        %817 = vst [vmem:[%s815 + $0x8] sm:$0xff] %v784
        %818 = vst [vmem:[%s815 + $0x10] sm:$0xff] %v785
        %819 = vst [vmem:[%s815 + $0x18] sm:$0xff] %v786
        %820 = vst [vmem:[%s815 + $0x20] sm:$0xff] %v787
        %821 = vst [vmem:[%s815 + $0x28] sm:$0xff] %v788
        %822 = vst [vmem:[%s815 + $0x30] sm:$0xff] %v789
        %823 = vst [vmem:[%s815 + $0x38] sm:$0xff] %v790
        %824 = vst [vmem:[%s815 + $0x40] sm:$0xff] %v791
        %825 = vst [vmem:[%s815 + $0x48] sm:$0xff] %v792
        %826 = vst [vmem:[%s815 + $0x50] sm:$0xff] %v793
        %827 = vst [vmem:[%s815 + $0x58] sm:$0xff] %v794
        %828 = vst [vmem:[%s815 + $0x60] sm:$0xff] %v795
        %829 = vst [vmem:[%s815 + $0x68] sm:$0xff] %v796
        %830 = vst [vmem:[%s815 + $0x70] sm:$0xff] %v797
        %831 = vst [vmem:[%s815 + $0x78] sm:$0xff] %v798
        %s832 = sand.u32 %s69, 1
        %s833 = scalar_lea.sflag [#allocation6], %s832
        %s834 = sand.u32 %s69, 1
        %s835 = smul.addr %s834, 256
        %s836 = scalar_lea.vmem [#allocation7], %s835
        // Predicated region
        $region61: #{tpu_custom_call.1} parent=23 // pred_check
          %p837 = pneg %p79
        $region62: #{tpu_custom_call.1} parent=23 // pred_check_branch
          %839 = sbr.rel (%p837) target = $region64
        $region63: #{tpu_custom_call.1} parent=23 // pred_region
          %s840 = smul.u32 16, %s24
          %s842 = ssub.s32 4096, 4096
          %843 = vsyncadd %s833, %s842
          %s844 = smul.addr %s23, 32
          %s845 = sadd.s32 %s840, %s844
          %s846 = smul.addr %s845, 128
          %s847 = scalar_lea.hbm %s2, %s846
          %s848 = sshll.u32 %s836, 4
          %s849 = int_to_ptr.vmem [resolvable:$true] %s848
          %854 = dma.vmem_to_hbm [thread:$0]  %s849, 4096, %s847, %s833, 128, 128, 8
        $region64: #{tpu_custom_call.1} parent=23 // pred_fallthru
          _
      $region24: #{tpu_custom_call.1} parent=5 // pred_fallthru
        _
      %p855 = scmp.le.s32.totalorder 2, %s14
      // Predicated region
      $region65: #{tpu_custom_call.1} parent=5 // pred_check
        %p856 = pneg %p855
      $region66: #{tpu_custom_call.1} parent=5 // pred_check_branch
        %858 = sbr.rel (%p856) target = $region68
      $region67: #{tpu_custom_call.1} parent=5 // pred_region
        %s859 = ssub.s32 %s14, 2
        // Predicated region
        $region69: #{tpu_custom_call.1} parent=67 // pred_check
          %p860 = pneg %p85
        $region70: #{tpu_custom_call.1} parent=67 // pred_check_branch
          %862 = sbr.rel (%p860) target = $region72
        $region71: #{tpu_custom_call.1} parent=67 // pred_region
          %s863 = sand.u32 %s70, 1
          %s864 = scalar_lea.sflag [#allocation6], %s863
          %s865 = sand.u32 %s70, 1
          %s866 = smul.addr %s865, 256
          %s867 = scalar_lea.vmem [#allocation7], %s866
          %868 = dma.done %s864, 4096
        $region72: #{tpu_custom_call.1} parent=67 // pred_fallthru
          _
      $region68: #{tpu_custom_call.1} parent=5 // pred_fallthru
        _
    $region6: #{tpu_custom_call.1} parent=1 // loop_footer
      %s18 = sadd.s32 1, %s14
    $region7: #{tpu_custom_call.1} parent=1 // loop_footer_branch
      %13 = sbr.rel target = $region3
    $region8: #{tpu_custom_call.1} parent=1 // loop_exit
      _
    %869 = vsyncpa [#allocation5], 1
    %s870 = scalar_lea.sflag [#allocation5], 1
    %871 = vsyncpa %s870, 1
    %872 = vsyncpa [#allocation6], 1
    %s873 = scalar_lea.sflag [#allocation6], 1
    %874 = vsyncpa %s873, 1
  %875 = vsyncmov [#allocation3]
  %s876 = vpop.sfrf %875
  %p877 = scmp.eq.s32.totalorder %s876, 0
  %p878 = pneg %p877
  %880 = shalt.err (%p878)
  %s881 = scalar_lea.sflag [#allocation3], 1
  %882 = vsyncmov %s881
  %s883 = vpop.sfrf %882
  %p884 = scmp.eq.s32.totalorder %s883, 0
  %p885 = pneg %p884
  %887 = shalt.err (%p885)

</llo_original>
